<compile_context>
chip_gen: v6e
topology: v6e:2x2x1
jax: 0.10.0
libtpu: 0.0.40
codegen_flags: <defaults>
</compile_context>

<pallas_src>
import functools

import jax
import jax.numpy as jnp
from jax.experimental import pallas as pl
from jax.experimental.pallas import tpu as pltpu

LN_EPS = 1e-5
TILE_N_MAX = 1024       # rows per grid step (multiple of 8 for f32 input tiles)
LANE = 128              # MXU-friendly padding for the small output projection


def _round_up(v, m):
    return (v + m - 1) // m * m


def _hetnet_kernel(x_ref, w1_ref, b1_ref, g1_ref, be1_ref, wo_ref, bo_ref,
                   o_ref, *, num_output):
    # x: (Tn, F) f32, w1: (F, H) bf16, b1/g1/be1: (1, H) f32,
    # wo: (H, O_pad) bf16, bo: (1, O) f32, o: (Tn, O) f32.

    # fc1 on the MXU (bf16 operands, f32 accumulation); cast x in-kernel.
    x = x_ref[...].astype(jnp.bfloat16)
    h = jnp.dot(x, w1_ref[...], preferred_element_type=jnp.float32)
    h = h + b1_ref[...]

    # LayerNorm over the hidden dim (f32), gamma folded into the rsqrt factor.
    mean = jnp.mean(h, axis=-1, keepdims=True)
    cen = h - mean
    var = jnp.mean(cen * cen, axis=-1, keepdims=True)
    h = cen * (g1_ref[...] * jax.lax.rsqrt(var + LN_EPS)) + be1_ref[...]

    # ReLU (dropout is identity in eval mode)
    h = jnp.maximum(h, 0.0)

    # Output projection on the MXU against the lane-padded wo, then slice the
    # value down to the real O columns before the (narrow) HBM store.
    out = jnp.dot(h.astype(jnp.bfloat16), wo_ref[...],
                  preferred_element_type=jnp.float32)
    o_ref[...] = (out[:, :num_output] + bo_ref[...]).astype(o_ref.dtype)


def prepare_params(w1, b1, gamma1, beta1, wo, bo):
    """One-time weight prep (hoisted out of the per-call forward).

    w1: (F, H), wo: (H, O) stored transposed (in, out); biases/LN params (1, dim).
    Returns kernel-ready params: bf16 matmul weights, wo padded to 128 lanes.
    """
    h, o = wo.shape
    o_pad = max(_round_up(o, LANE), LANE)
    w1_bf = w1.astype(jnp.bfloat16)
    wo_bf = jnp.pad(wo, ((0, 0), (0, o_pad - o))).astype(jnp.bfloat16)
    return (w1_bf, b1.astype(jnp.float32), gamma1.astype(jnp.float32),
            beta1.astype(jnp.float32), wo_bf, bo.astype(jnp.float32))


@jax.jit
def hetnet_forward(x, w1_bf, b1, gamma1, beta1, wo_bf, bo):
    n, f = x.shape
    hid = w1_bf.shape[1]
    o_pad = wo_bf.shape[1]
    o = bo.shape[1]

    # Row tile: large for streaming efficiency, multiple of 8 (f32 sublanes);
    # capped so the grid has >=2 steps when possible (dual-TC sharding on v7x).
    tile_n = min(TILE_N_MAX, _round_up(n, 8))
    if n >= 16:
        tile_n = min(tile_n, _round_up(pl.cdiv(n, 2), 8))
    grid = (pl.cdiv(n, tile_n),)

    const = lambda shape: pl.BlockSpec(shape, lambda i: (0, 0))

    return pl.pallas_call(
        functools.partial(_hetnet_kernel, num_output=o),
        out_shape=jax.ShapeDtypeStruct((n, o), jnp.float32),
        grid_spec=pltpu.PrefetchScalarGridSpec(
            num_scalar_prefetch=0,
            grid=grid,
            in_specs=[
                pl.BlockSpec((tile_n, f), lambda i: (i, 0)),   # x: streamed
                const((f, hid)),                                # w1: resident
                const((1, hid)),                                # b1
                const((1, hid)),                                # gamma
                const((1, hid)),                                # beta
                const((hid, o_pad)),                            # wo: resident
                const((1, o)),                                  # bo
            ],
            out_specs=pl.BlockSpec((tile_n, o), lambda i: (i, 0)),
        ),
        compiler_params=pltpu.CompilerParams(
            dimension_semantics=("parallel",),
        ),
    )(x, w1_bf, b1, gamma1, beta1, wo_bf, bo)


def init_params(key, num_feature, n_hidden, num_output):
    """Deterministic init mimicking nn.Linear defaults (uniform +-1/sqrt(fan_in))."""
    k1, k2, k3, k4 = jax.random.split(key, 4)
    lim1 = 1.0 / jnp.sqrt(jnp.float32(num_feature))
    limo = 1.0 / jnp.sqrt(jnp.float32(n_hidden))
    # weights stored transposed: (in, out)
    w1 = jax.random.uniform(k1, (num_feature, n_hidden), jnp.float32, -lim1, lim1)
    b1 = jax.random.uniform(k2, (1, n_hidden), jnp.float32, -lim1, lim1)
    gamma1 = jnp.ones((1, n_hidden), jnp.float32)   # LayerNorm weight
    beta1 = jnp.zeros((1, n_hidden), jnp.float32)   # LayerNorm bias
    wo = jax.random.uniform(k3, (n_hidden, num_output), jnp.float32, -limo, limo)
    bo = jax.random.uniform(k4, (1, num_output), jnp.float32, -limo, limo)
    return w1, b1, gamma1, beta1, wo, bo


def hetnet_reference(x, w1, b1, gamma1, beta1, wo, bo):
    """Pure-JAX reference with the same bf16 MXU operands / f32 accumulation."""
    h = jnp.dot(x.astype(jnp.bfloat16), w1.astype(jnp.bfloat16),
                preferred_element_type=jnp.float32) + b1
    mean = h.mean(-1, keepdims=True)
    var = ((h - mean) ** 2).mean(-1, keepdims=True)
    h = (h - mean) * jax.lax.rsqrt(var + LN_EPS)
    h = h * gamma1 + beta1
    h = jnp.maximum(h, 0.0)
    out = jnp.dot(h.astype(jnp.bfloat16), wo.astype(jnp.bfloat16),
                  preferred_element_type=jnp.float32) + bo
    return out


if __name__ == "__main__":
    # Small shapes consistent with the module's forward:
    #   N nodes, num_feature features, n_hidden hidden units, num_output classes.
    N, NUM_FEATURE, N_HIDDEN, NUM_OUTPUT = 8, 32, 128, 2

    key = jax.random.PRNGKey(0)
    kx, kp = jax.random.split(key)
    x = jax.random.normal(kx, (N, NUM_FEATURE), jnp.float32)
    raw_params = init_params(kp, NUM_FEATURE, N_HIDDEN, NUM_OUTPUT)

    # One-time weight prep (bf16 cast, lane-padded wo) hoisted out of forward.
    kernel_params = prepare_params(*raw_params)

    # mask = arange(N) -> x[mask] is identity; applied implicitly.
    out = hetnet_forward(x, *kernel_params)
    out = jax.block_until_ready(out)

    ref = hetnet_reference(x, *raw_params)
    assert out.shape == (N, NUM_OUTPUT), out.shape
    assert jnp.allclose(out, ref, atol=1e-2, rtol=1e-2), (out, ref)

    print("KERNEL_OK")
</pallas_src>

<mosaic_0001>
module attributes {stable_mosaic.version = 11 : i64} {
  func.func @_hetnet_kernel(%arg0: i32, %arg1: memref<8x32xf32, #tpu.memory_space<vmem>>, %arg2: memref<32x128xbf16, #tpu.memory_space<vmem>>, %arg3: memref<1x128xf32, #tpu.memory_space<vmem>>, %arg4: memref<1x128xf32, #tpu.memory_space<vmem>>, %arg5: memref<1x128xf32, #tpu.memory_space<vmem>>, %arg6: memref<128x128xbf16, #tpu.memory_space<vmem>>, %arg7: memref<1x2xf32, #tpu.memory_space<vmem>>, %arg8: memref<8x2xf32, #tpu.memory_space<vmem>>) attributes {dimension_semantics = [#tpu.dimension_semantics<parallel>], iteration_bounds = array<i64: 1>, scalar_prefetch = 0 : i64, scratch_operands = 0 : i64, tpu.core_type = #tpu.core_type<tc>, window_params = [{transform_indices = @transform_0, window_bounds = array<i64: 8, 32>}, {pipeline_mode = #tpu.pipeline_mode<synchronous>, transform_indices = @transform_1, window_bounds = array<i64: 32, 128>}, {pipeline_mode = #tpu.pipeline_mode<synchronous>, transform_indices = @transform_2, window_bounds = array<i64: 1, 128>}, {pipeline_mode = #tpu.pipeline_mode<synchronous>, transform_indices = @transform_3, window_bounds = array<i64: 1, 128>}, {pipeline_mode = #tpu.pipeline_mode<synchronous>, transform_indices = @transform_4, window_bounds = array<i64: 1, 128>}, {pipeline_mode = #tpu.pipeline_mode<synchronous>, transform_indices = @transform_5, window_bounds = array<i64: 128, 128>}, {pipeline_mode = #tpu.pipeline_mode<synchronous>, transform_indices = @transform_6, window_bounds = array<i64: 1, 2>}, {transform_indices = @transform_7, window_bounds = array<i64: 8, 2>}]} {
    %c0 = arith.constant 0 : index
    %c0_0 = arith.constant 0 : index
    %0 = vector.load %arg1[%c0, %c0_0] : memref<8x32xf32, #tpu.memory_space<vmem>>, vector<8x32xf32>
    %1 = arith.truncf %0 : vector<8x32xf32> to vector<8x32xbf16>
    %c0_1 = arith.constant 0 : index
    %c0_2 = arith.constant 0 : index
    %2 = vector.load %arg2[%c0_1, %c0_2] : memref<32x128xbf16, #tpu.memory_space<vmem>>, vector<32x128xbf16>
    %cst = arith.constant dense<0.000000e+00> : vector<8x128xf32>
    %3 = tpu.matmul %1, %2, %cst {dimension_numbers = #tpu.dot_dimension_numbers<[1], [0], [0], [1], [0, 0, 1, 1], [], []>} : vector<8x32xbf16>, vector<32x128xbf16>, vector<8x128xf32> -> vector<8x128xf32>
    %c0_3 = arith.constant 0 : index
    %c0_4 = arith.constant 0 : index
    %4 = vector.load %arg3[%c0_3, %c0_4] : memref<1x128xf32, #tpu.memory_space<vmem>>, vector<1x128xf32>
    %5 = vector.broadcast %4 : vector<1x128xf32> to vector<8x128xf32>
    %6 = arith.addf %3, %5 : vector<8x128xf32>
    %cst_5 = arith.constant dense<0.000000e+00> : vector<8xf32>
    %7 = vector.multi_reduction <add>, %6, %cst_5 [1] : vector<8x128xf32> to vector<8xf32>
    %8 = vector.shape_cast %7 : vector<8xf32> to vector<8x1xf32>
    %cst_6 = arith.constant 1.280000e+02 : f32
    %9 = vector.broadcast %cst_6 : f32 to vector<8x1xf32>
    %10 = arith.divf %8, %9 : vector<8x1xf32>
    %11 = vector.broadcast %10 : vector<8x1xf32> to vector<8x128xf32>
    %12 = arith.subf %6, %11 : vector<8x128xf32>
    %13 = arith.mulf %12, %12 : vector<8x128xf32>
    %cst_7 = arith.constant dense<0.000000e+00> : vector<8xf32>
    %14 = vector.multi_reduction <add>, %13, %cst_7 [1] : vector<8x128xf32> to vector<8xf32>
    %15 = vector.shape_cast %14 : vector<8xf32> to vector<8x1xf32>
    %cst_8 = arith.constant 1.280000e+02 : f32
    %16 = vector.broadcast %cst_8 : f32 to vector<8x1xf32>
    %17 = arith.divf %15, %16 : vector<8x1xf32>
    %c0_9 = arith.constant 0 : index
    %c0_10 = arith.constant 0 : index
    %18 = vector.load %arg4[%c0_9, %c0_10] : memref<1x128xf32, #tpu.memory_space<vmem>>, vector<1x128xf32>
    %cst_11 = arith.constant 9.99999974E-6 : f32
    %19 = vector.broadcast %cst_11 : f32 to vector<8x1xf32>
    %20 = arith.addf %17, %19 : vector<8x1xf32>
    %21 = math.rsqrt %20 : vector<8x1xf32>
    %22 = vector.broadcast %18 : vector<1x128xf32> to vector<8x128xf32>
    %23 = vector.broadcast %21 : vector<8x1xf32> to vector<8x128xf32>
    %24 = arith.mulf %22, %23 : vector<8x128xf32>
    %25 = arith.mulf %12, %24 : vector<8x128xf32>
    %c0_12 = arith.constant 0 : index
    %c0_13 = arith.constant 0 : index
    %26 = vector.load %arg5[%c0_12, %c0_13] : memref<1x128xf32, #tpu.memory_space<vmem>>, vector<1x128xf32>
    %27 = vector.broadcast %26 : vector<1x128xf32> to vector<8x128xf32>
    %28 = arith.addf %25, %27 : vector<8x128xf32>
    %cst_14 = arith.constant 0.000000e+00 : f32
    %29 = vector.broadcast %cst_14 : f32 to vector<8x128xf32>
    %30 = arith.maximumf %28, %29 : vector<8x128xf32>
    %31 = arith.truncf %30 : vector<8x128xf32> to vector<8x128xbf16>
    %c0_15 = arith.constant 0 : index
    %c0_16 = arith.constant 0 : index
    %32 = vector.load %arg6[%c0_15, %c0_16] : memref<128x128xbf16, #tpu.memory_space<vmem>>, vector<128x128xbf16>
    %cst_17 = arith.constant dense<0.000000e+00> : vector<8x128xf32>
    %33 = tpu.matmul %31, %32, %cst_17 {dimension_numbers = #tpu.dot_dimension_numbers<[1], [0], [0], [1], [0, 0, 1, 1], [], []>} : vector<8x128xbf16>, vector<128x128xbf16>, vector<8x128xf32> -> vector<8x128xf32>
    %34 = vector.extract_strided_slice %33 {offsets = [0, 0], sizes = [8, 2], strides = [1, 1]} : vector<8x128xf32> to vector<8x2xf32>
    %c0_18 = arith.constant 0 : index
    %c0_19 = arith.constant 0 : index
    %35 = vector.load %arg7[%c0_18, %c0_19] : memref<1x2xf32, #tpu.memory_space<vmem>>, vector<1x2xf32>
    %36 = vector.broadcast %35 : vector<1x2xf32> to vector<8x2xf32>
    %37 = arith.addf %34, %36 : vector<8x2xf32>
    %c0_20 = arith.constant 0 : index
    %c0_21 = arith.constant 0 : index
    %38 = vector.load %arg8[%c0_20, %c0_21] : memref<8x2xf32, #tpu.memory_space<vmem>>, vector<8x2xf32>
    tpu.vector_store %arg8[%c0_20, %c0_21], %37 {strides = array<i32>} : memref<8x2xf32, #tpu.memory_space<vmem>>, vector<8x2xf32>,
    return
  }
  func.func @transform_0(%arg0: i32) -> (i32, i32) {
    %c0_i32 = arith.constant 0 : i32
    %c0_i32_0 = arith.constant 0 : i32
    return %arg0, %c0_i32 : i32, i32
  }
  func.func @transform_1(%arg0: i32) -> (i32, i32) {
    %c0_i32 = arith.constant 0 : i32
    %c0_i32_0 = arith.constant 0 : i32
    %c0_i32_1 = arith.constant 0 : i32
    return %c0_i32, %c0_i32_0 : i32, i32
  }
  func.func @transform_2(%arg0: i32) -> (i32, i32) {
    %c0_i32 = arith.constant 0 : i32
    %c0_i32_0 = arith.constant 0 : i32
    %c0_i32_1 = arith.constant 0 : i32
    return %c0_i32, %c0_i32_0 : i32, i32
  }
  func.func @transform_3(%arg0: i32) -> (i32, i32) {
    %c0_i32 = arith.constant 0 : i32
    %c0_i32_0 = arith.constant 0 : i32
    %c0_i32_1 = arith.constant 0 : i32
    return %c0_i32, %c0_i32_0 : i32, i32
  }
  func.func @transform_4(%arg0: i32) -> (i32, i32) {
    %c0_i32 = arith.constant 0 : i32
    %c0_i32_0 = arith.constant 0 : i32
    %c0_i32_1 = arith.constant 0 : i32
    return %c0_i32, %c0_i32_0 : i32, i32
  }
  func.func @transform_5(%arg0: i32) -> (i32, i32) {
    %c0_i32 = arith.constant 0 : i32
    %c0_i32_0 = arith.constant 0 : i32
    %c0_i32_1 = arith.constant 0 : i32
    return %c0_i32, %c0_i32_0 : i32, i32
  }
  func.func @transform_6(%arg0: i32) -> (i32, i32) {
    %c0_i32 = arith.constant 0 : i32
    %c0_i32_0 = arith.constant 0 : i32
    %c0_i32_1 = arith.constant 0 : i32
    return %c0_i32, %c0_i32_0 : i32, i32
  }
  func.func @transform_7(%arg0: i32) -> (i32, i32) {
    %c0_i32 = arith.constant 0 : i32
    %c0_i32_0 = arith.constant 0 : i32
    return %arg0, %c0_i32 : i32, i32
  }
}

</mosaic_0001>

<llo_original>
// kernel: hetnet_forward.1
$region0: #{hetnet_forward.1}
  #allocation0 [shape = 'u32[]', space=smem, size = 0x4, offset = 0x4, fixed_abs, tag = 'smem constant byte address 0x4 - core index']
  #allocation1 [shape = 'u32[144,128]{1,0:T(1,128)}', space=vmem, size = 0x12000, scoped, tag = 'internal scratch']
  %s0 = inlined_call_operand.hbm [shape: f32[8,32], index: 0, kind: input, shape index: {}]
  %s1 = inlined_call_operand.hbm [shape: bf16[32,128], index: 1, kind: input, shape index: {}]
  %s2 = inlined_call_operand.vmem [shape: f32[1,128], index: 2, kind: input, shape index: {}]
  %s3 = inlined_call_operand.vmem [shape: f32[1,128], index: 3, kind: input, shape index: {}]
  %s4 = inlined_call_operand.vmem [shape: f32[1,128], index: 4, kind: input, shape index: {}]
  %s5 = inlined_call_operand.hbm [shape: bf16[128,128], index: 5, kind: input, shape index: {}]
  %s6 = inlined_call_operand.vmem [shape: f32[1,2], index: 6, kind: input, shape index: {}]
  %s7 = inlined_call_operand.vmem [shape: f32[8,2], index: 7, kind: output, shape index: {}]
  %s8 = sld [smem:[#allocation0]]
  $region50: #{hetnet_forward.1} parent=0
    _
  %s10 = ssub.s32 1, %s8
  %s11 = scalar_select 0, %s10, %s8
  $region1: #{hetnet_forward.1} parent=0
    #allocation2 [shape = 'u8[4096]{0}', space=vmem, size = 0x1000, scoped, tag = 'input window, operand 0, single buffered']
    #allocation3 [shape = 's32[1]{0}', space=sflag, size = 0x4, scoped, tag = 'scoped memory for hetnet_forward.1']
    #allocation4 [shape = 'u8[8192]{0}', space=vmem, size = 0x2000, scoped, tag = 'input window, operand 1, single buffered']
    #allocation5 [shape = 's32[1]{0}', space=sflag, size = 0x4, scoped, tag = 'scoped memory for hetnet_forward.1']
    #allocation6 [shape = 'u8[32768]{0}', space=vmem, size = 0x8000, scoped, tag = 'input window, operand 5, single buffered']
    %12 = vsyncpa [#allocation3], 0
    %13 = vsyncpa [#allocation5], 0
    // Predicated region
    $region2: #{hetnet_forward.1} parent=1 // pred_check
      _
    $region3: #{hetnet_forward.1} parent=1 // pred_check_branch
      %15 = sbr.rel (0) target = $region5
    $region4: #{hetnet_forward.1} parent=1 // pred_region
      %s17 = ssub.s32 128, 128
      %18 = vsyncadd [#allocation3], %s17
      %s20 = sshll.u32 [#allocation2], 4
      %s21 = int_to_ptr.vmem [resolvable:$true] %s20
      %23 = dma.hbm_to_vmem [thread:$0]  %s0, 128, %s21, [#allocation3]
    $region5: #{hetnet_forward.1} parent=1 // pred_fallthru
      _
    // Predicated region
    $region6: #{hetnet_forward.1} parent=1 // pred_check
      _
    $region7: #{hetnet_forward.1} parent=1 // pred_check_branch
      %25 = sbr.rel (0) target = $region9
    $region8: #{hetnet_forward.1} parent=1 // pred_region
      %s27 = ssub.s32 256, 256
      %28 = vsyncadd [#allocation5], %s27
      %s29 = sshll.u32 [#allocation4], 4
      %s30 = int_to_ptr.vmem [resolvable:$true] %s29
      %35 = dma.hbm_to_vmem [thread:$0]  %s1, 256, %s30, [#allocation5], 64, 64, 4
    $region9: #{hetnet_forward.1} parent=1 // pred_fallthru
      _
    // Predicated region
    $region10: #{hetnet_forward.1} parent=1 // pred_check
      _
    $region11: #{hetnet_forward.1} parent=1 // pred_check_branch
      %37 = sbr.rel (0) target = $region13
    $region12: #{hetnet_forward.1} parent=1 // pred_region
      _
    $region13: #{hetnet_forward.1} parent=1 // pred_fallthru
      _
    // Predicated region
    $region14: #{hetnet_forward.1} parent=1 // pred_check
      _
    $region15: #{hetnet_forward.1} parent=1 // pred_check_branch
      %39 = sbr.rel (0) target = $region17
    $region16: #{hetnet_forward.1} parent=1 // pred_region
      _
    $region17: #{hetnet_forward.1} parent=1 // pred_fallthru
      _
    // Predicated region
    $region18: #{hetnet_forward.1} parent=1 // pred_check
      _
    $region19: #{hetnet_forward.1} parent=1 // pred_check_branch
      %41 = sbr.rel (0) target = $region21
    $region20: #{hetnet_forward.1} parent=1 // pred_region
      _
    $region21: #{hetnet_forward.1} parent=1 // pred_fallthru
      _
    // Predicated region
    $region22: #{hetnet_forward.1} parent=1 // pred_check
      _
    $region23: #{hetnet_forward.1} parent=1 // pred_check_branch
      %43 = sbr.rel (0) target = $region25
    $region24: #{hetnet_forward.1} parent=1 // pred_region
      %s45 = ssub.s32 1024, 1024
      %46 = vsyncadd [#allocation5], %s45
      %s47 = sshll.u32 [#allocation6], 4
      %s48 = int_to_ptr.vmem [resolvable:$true] %s47
      %53 = dma.hbm_to_vmem [thread:$0]  %s5, 1024, %s48, [#allocation5], 64, 64, 4
    $region25: #{hetnet_forward.1} parent=1 // pred_fallthru
      _
    // Predicated region
    $region26: #{hetnet_forward.1} parent=1 // pred_check
      _
    $region27: #{hetnet_forward.1} parent=1 // pred_check_branch
      %55 = sbr.rel (0) target = $region29
    $region28: #{hetnet_forward.1} parent=1 // pred_region
      _
    $region29: #{hetnet_forward.1} parent=1 // pred_fallthru
      _
    // Predicated region
    $region30: #{hetnet_forward.1} parent=1 // pred_check
      _
    $region31: #{hetnet_forward.1} parent=1 // pred_check_branch
      %57 = sbr.rel (0) target = $region33
    $region32: #{hetnet_forward.1} parent=1 // pred_region
      %58 = dma.done [#allocation3], 128
    $region33: #{hetnet_forward.1} parent=1 // pred_fallthru
      _
    // Predicated region
    $region34: #{hetnet_forward.1} parent=1 // pred_check
      _
    $region35: #{hetnet_forward.1} parent=1 // pred_check_branch
      %60 = sbr.rel (0) target = $region37
    $region36: #{hetnet_forward.1} parent=1 // pred_region
      %61 = dma.done [#allocation5], 256
    $region37: #{hetnet_forward.1} parent=1 // pred_fallthru
      _
    // Predicated region
    $region38: #{hetnet_forward.1} parent=1 // pred_check
      _
    $region39: #{hetnet_forward.1} parent=1 // pred_check_branch
      %63 = sbr.rel (0) target = $region41
    $region40: #{hetnet_forward.1} parent=1 // pred_region
      %64 = dma.done [#allocation5], 1024
    $region41: #{hetnet_forward.1} parent=1 // pred_fallthru
      _
    %v66 = vld [vmem:[#allocation2] sm:$0xff]
    %v67 = vpack.c.bf16 %v66, %v66
    %v68 = vld [vmem:[#allocation4] sm:$0xf]
    %v69 = vld [vmem:[#allocation4 + $0x4] sm:$0xf]
    %v70 = vld [vmem:[#allocation4 + $0x8] sm:$0xf]
    %v71 = vld [vmem:[#allocation4 + $0xc] sm:$0xf]
    %v72 = vld [vmem:[%s2] sm:$0x1]
    %v74 = vlaneseq
    %v75 = vshrl.u32 %v74, 7
    %v76 = vsub.s32 0, %v75
    %v77 = vrot.slane %v72, %v76
    %v83 = vunpack.c.l.b16 %v68
    %v84 = vunpack.c.l.b16 %v69
    %v85 = vunpack.c.l.b16 %v70
    %v86 = vunpack.c.l.b16 %v71
    %v87 = vpack.c.b16 %v84, %v83
    %v88 = vpack.c.b16 %v86, %v85
    %vm91 = vcmask 261120
    %v93 = vsel %vm91, %v67, 0
    %95 = vmatprep.subr.bf16.mxu0 0
    %96 = vmatpush1.bf16.msra.mxu0 0
    %97 = vmatprep.subr.bf16.mxu0 0
    %98 = vmatpush1.bf16.msra.mxu0 0
    %99 = vmatprep.subr.bf16.mxu0 0
    %100 = vmatpush1.bf16.msra.mxu0 0
    %101 = vmatprep.subr.bf16.mxu0 0
    %102 = vmatpush1.bf16.msra.mxu0 0
    %103 = vmatprep.subr.bf16.mxu0 0
    %104 = vmatpush1.bf16.msra.mxu0 0
    %105 = vmatprep.subr.bf16.mxu0 0
    %106 = vmatpush1.bf16.msra.mxu0 0
    %107 = vmatprep.subr.bf16.mxu0 0
    %108 = vmatpush1.bf16.msra.mxu0 %v88
    %109 = vmatprep.subr.bf16.mxu0 0
    %110 = vmatpush1.bf16.msra.mxu0 %v87
    %111 = vmatprep.subr.bf16.mxu0 0
    %112 = vmatpush2.bf16.msra.mxu0 0
    %113 = vmatprep.subr.bf16.mxu0 0
    %114 = vmatpush2.bf16.msra.mxu0 0
    %115 = vmatprep.subr.bf16.mxu0 0
    %116 = vmatpush2.bf16.msra.mxu0 0
    %117 = vmatprep.subr.bf16.mxu0 0
    %118 = vmatpush2.bf16.msra.mxu0 0
    %119 = vmatprep.subr.bf16.mxu0 0
    %120 = vmatpush2.bf16.msra.mxu0 0
    %121 = vmatprep.subr.bf16.mxu0 0
    %122 = vmatpush2.bf16.msra.mxu0 0
    %123 = vmatprep.subr.bf16.mxu0 0
    %124 = vmatpush2.bf16.msra.mxu0 0
    %125 = vmatprep.subr.bf16.mxu0 0
    %126 = vmatpush2.bf16.msra.mxu0 0
    %127 = vmatprep.mubr.bf16.mxu0 0
    %128 = vmatmul.mubr.bf16.gmra.mxu0 %v93
    %v129 = vpop.f32.mrf.mxu0
    %v130 = vadd.f32 %v77, %v129
    %v131 = vpop.f32.mrf.mxu0
    %v132 = vpop.f32.mrf.mxu0
    %v133 = vpop.f32.mrf.mxu0
    %134 = vdwg.mxu0
    %135 = vadd.xlane.f32.xlu0 %v130
    %v136 = vpop.xlane.xlu0 %135
    %v137 = vrcp.pop 128.0
    %v138 = vmul.f32 %v136, %v137
    %v139 = vsub.f32 %v130, %v138
    %v140 = vmul.f32 %v139, %v139
    %141 = vadd.xlane.f32.xlu0 %v140
    %v142 = vpop.xlane.xlu0 %141
    %v143 = vmul.f32 %v142, %v137
    %v144 = vld [vmem:[%s3] sm:$0x1]
    %v145 = vadd.f32 %v143, 1e-05
    %v146 = vrsqrt.pop %v145
    %v148 = vlaneseq
    %v149 = vshrl.u32 %v148, 7
    %v150 = vsub.s32 0, %v149
    %v151 = vrot.slane %v144, %v150
    %v153 = vmul.f32 %v151, %v146
    %v154 = vmul.f32 %v139, %v153
    %v155 = vld [vmem:[%s4] sm:$0x1]
    %v157 = vlaneseq
    %v158 = vshrl.u32 %v157, 7
    %v159 = vsub.s32 0, %v158
    %v160 = vrot.slane %v155, %v159
    %v162 = vadd.f32 %v154, %v160
    %v163 = vmax.f32 %v162, 0.0
    %v164 = vpack.c.bf16 %v163, %v163
    %v165 = vld [vmem:[#allocation6] sm:$0xf]
    %v166 = vld [vmem:[#allocation6 + $0x4] sm:$0xf]
    %v167 = vld [vmem:[#allocation6 + $0x8] sm:$0xf]
    %v168 = vld [vmem:[#allocation6 + $0xc] sm:$0xf]
    %v169 = vld [vmem:[#allocation6 + $0x10] sm:$0xf]
    %v170 = vld [vmem:[#allocation6 + $0x14] sm:$0xf]
    %v171 = vld [vmem:[#allocation6 + $0x18] sm:$0xf]
    %v172 = vld [vmem:[#allocation6 + $0x1c] sm:$0xf]
    %v173 = vld [vmem:[#allocation6 + $0x20] sm:$0xf]
    %v174 = vld [vmem:[#allocation6 + $0x24] sm:$0xf]
    %v175 = vld [vmem:[#allocation6 + $0x28] sm:$0xf]
    %v176 = vld [vmem:[#allocation6 + $0x2c] sm:$0xf]
    %v177 = vld [vmem:[#allocation6 + $0x30] sm:$0xf]
    %v178 = vld [vmem:[#allocation6 + $0x34] sm:$0xf]
    %v179 = vld [vmem:[#allocation6 + $0x38] sm:$0xf]
    %v180 = vld [vmem:[#allocation6 + $0x3c] sm:$0xf]
    %v197 = vunpack.c.l.b16 %v165
    %v198 = vunpack.c.l.b16 %v166
    %v199 = vunpack.c.l.b16 %v167
    %v200 = vunpack.c.l.b16 %v168
    %v201 = vunpack.c.l.b16 %v169
    %v202 = vunpack.c.l.b16 %v170
    %v203 = vunpack.c.l.b16 %v171
    %v204 = vunpack.c.l.b16 %v172
    %v205 = vunpack.c.l.b16 %v173
    %v206 = vunpack.c.l.b16 %v174
    %v207 = vunpack.c.l.b16 %v175
    %v208 = vunpack.c.l.b16 %v176
    %v209 = vunpack.c.l.b16 %v177
    %v210 = vunpack.c.l.b16 %v178
    %v211 = vunpack.c.l.b16 %v179
    %v212 = vunpack.c.l.b16 %v180
    %v213 = vpack.c.b16 %v198, %v197
    %v214 = vpack.c.b16 %v200, %v199
    %v215 = vpack.c.b16 %v202, %v201
    %v216 = vpack.c.b16 %v204, %v203
    %v217 = vpack.c.b16 %v206, %v205
    %v218 = vpack.c.b16 %v208, %v207
    %v219 = vpack.c.b16 %v210, %v209
    %v220 = vpack.c.b16 %v212, %v211
    %229 = vmatprep.subr.bf16.mxu0 0
    %230 = vmatpush1.bf16.msra.mxu0 %v220
    %231 = vmatprep.subr.bf16.mxu0 0
    %232 = vmatpush1.bf16.msra.mxu0 %v219
    %233 = vmatprep.subr.bf16.mxu0 0
    %234 = vmatpush1.bf16.msra.mxu0 %v218
    %235 = vmatprep.subr.bf16.mxu0 0
    %236 = vmatpush1.bf16.msra.mxu0 %v217
    %237 = vmatprep.subr.bf16.mxu0 0
    %238 = vmatpush1.bf16.msra.mxu0 %v216
    %239 = vmatprep.subr.bf16.mxu0 0
    %240 = vmatpush1.bf16.msra.mxu0 %v215
    %241 = vmatprep.subr.bf16.mxu0 0
    %242 = vmatpush1.bf16.msra.mxu0 %v214
    %243 = vmatprep.subr.bf16.mxu0 0
    %244 = vmatpush1.bf16.msra.mxu0 %v213
    %245 = vmatprep.subr.bf16.mxu0 0
    %246 = vmatpush2.bf16.msra.mxu0 0
    %247 = vmatprep.subr.bf16.mxu0 0
    %248 = vmatpush2.bf16.msra.mxu0 0
    %249 = vmatprep.subr.bf16.mxu0 0
    %250 = vmatpush2.bf16.msra.mxu0 0
    %251 = vmatprep.subr.bf16.mxu0 0
    %252 = vmatpush2.bf16.msra.mxu0 0
    %253 = vmatprep.subr.bf16.mxu0 0
    %254 = vmatpush2.bf16.msra.mxu0 0
    %255 = vmatprep.subr.bf16.mxu0 0
    %256 = vmatpush2.bf16.msra.mxu0 0
    %257 = vmatprep.subr.bf16.mxu0 0
    %258 = vmatpush2.bf16.msra.mxu0 0
    %259 = vmatprep.subr.bf16.mxu0 0
    %260 = vmatpush2.bf16.msra.mxu0 0
    %261 = vmatprep.mubr.bf16.mxu0 0
    %262 = vmatmul.mubr.bf16.gmra.mxu0 %v164
    %v263 = vpop.f32.mrf.mxu0
    %v264 = vadd.f32 0.0, %v263
    %v265 = vpop.f32.mrf.mxu0
    %v266 = vpop.f32.mrf.mxu0
    %v267 = vpop.f32.mrf.mxu0
    %268 = vdwg.mxu0
    %v269 = vld [vmem:[%s6] sm:$0x1]
    %v271 = vlaneseq
    %v272 = vshrl.u32 %v271, 7
    %v273 = vsub.s32 0, %v272
    %v274 = vrot.slane %v269, %v273
    %v276 = vadd.f32 %v264, %v274
    %vm277 = vcmask 15360
    %278 = vst.msk [vmem:[%s7] sm:$0xff] %vm277, %v276
    // Predicated region
    $region42: #{hetnet_forward.1} parent=1 // pred_check
      _
    $region43: #{hetnet_forward.1} parent=1 // pred_check_branch
      %280 = sbr.rel (0) target = $region45
    $region44: #{hetnet_forward.1} parent=1 // pred_region
      _
    $region45: #{hetnet_forward.1} parent=1 // pred_fallthru
      _
    // Predicated region
    $region46: #{hetnet_forward.1} parent=1 // pred_check
      _
    $region47: #{hetnet_forward.1} parent=1 // pred_check_branch
      %282 = sbr.rel (0) target = $region49
    $region48: #{hetnet_forward.1} parent=1 // pred_region
      _
    $region49: #{hetnet_forward.1} parent=1 // pred_fallthru
      _
    %283 = vsyncpa [#allocation3], 1
    %284 = vsyncpa [#allocation5], 1

</llo_original>
